<compile_context>
chip_gen: v7x
topology: tpu7x:2x2x1
jax: 0.10.0
libtpu: 0.0.40
codegen_flags: <defaults>
</compile_context>

<pallas_src>
import math

import jax
import jax.numpy as jnp
from jax.experimental import pallas as pl
from jax.experimental.pallas import tpu as pltpu


# ----------------------------- module hyperparams (defaults) -----------------
INPUT_SIZE = 40       # last dim of the fbank features
N_OUT = 20            # number of DCT coefficients
ORTHO_NORM = True

ROW_TILE = 512        # rows (flattened B*T) per grid step; multiple of 8


def _round_up(x, m):
    return ((x + m - 1) // m) * m


# ----------------------------- DCT matrix (mirrors DCT.__init__) --------------
def make_dct_matrix(input_size=INPUT_SIZE, n_out=N_OUT, ortho_norm=ORTHO_NORM):
    if n_out > input_size:
        raise ValueError(
            "Cannot select more DCT coefficients than inputs "
            "(n_out=%i, n_in=%i)" % (n_out, input_size))
    n = jnp.arange(float(input_size), dtype=jnp.float32)            # (F,)
    k = jnp.arange(float(n_out), dtype=jnp.float32)[:, None]        # (M, 1)
    dct = jnp.cos(math.pi / float(input_size) * (n + 0.5) * k)      # (M, F)
    if ortho_norm:
        dct = dct.at[0].multiply(1.0 / math.sqrt(2.0))
        dct = dct * math.sqrt(2.0 / float(input_size))
    else:
        dct = dct * 2.0
    return dct.T.astype(jnp.float32)                                # (F, M)


# ----------------------------- Pallas kernel ---------------------------------
def _dct_kernel(x_ref, dct_ref, out_ref):
    # x_ref: (tR, F) VMEM, dct_ref: (F, M) VMEM, out_ref: (tR, M) VMEM
    out_ref[...] = jnp.dot(
        x_ref[...], dct_ref[...], preferred_element_type=jnp.float32
    ).astype(out_ref.dtype)


def dct_forward(x, dct_mat, row_tile=ROW_TILE):
    """Mirrors DCT.forward.

    x: (B, T, F) or (B, T, F, C) float32
    dct_mat: (F, M) float32
    returns (B, T, M) or (B, T, M, C)
    """
    input_shape = x.shape
    if x.ndim == 4:
        # Same raw reshape (not a transpose) as the PyTorch module.
        x = x.reshape(input_shape[0] * input_shape[3],
                      input_shape[1], input_shape[2])

    Bx, T, F = x.shape
    Fm, M = dct_mat.shape
    assert F == Fm, f"input last dim {F} != dct_mat rows {Fm}"

    # Flatten (B, T) into one row axis and tile it.
    N = Bx * T
    x2 = x.reshape(N, F)
    tR = min(row_tile, _round_up(N, 8))
    Np = _round_up(N, tR)
    if Np != N:
        x2 = jnp.pad(x2, ((0, Np - N), (0, 0)))
    grid = (Np // tR,)

    cost = pl.CostEstimate(
        flops=2 * Np * F * M,
        transcendentals=0,
        bytes_accessed=4 * (Np * F + F * M + Np * M),
    )

    out = pl.pallas_call(
        _dct_kernel,
        out_shape=jax.ShapeDtypeStruct((Np, M), jnp.float32),
        grid_spec=pltpu.PrefetchScalarGridSpec(
            num_scalar_prefetch=0,
            grid=grid,
            in_specs=[
                pl.BlockSpec((tR, F), lambda r: (r, 0)),
                pl.BlockSpec((F, M), lambda r: (0, 0)),
            ],
            out_specs=pl.BlockSpec((tR, M), lambda r: (r, 0)),
        ),
        compiler_params=pltpu.CompilerParams(
            dimension_semantics=("parallel",),
            vmem_limit_bytes=32 * 1024 * 1024,
        ),
        cost_estimate=cost,
    )(x2, dct_mat)

    out = out[:N].reshape(Bx, T, M)
    if len(input_shape) == 4:
        # Same raw reshape back as the PyTorch module.
        out = out.reshape(input_shape[0], out.shape[1], out.shape[2],
                          input_shape[3])
    return out


# ----------------------------- pure-JAX reference ----------------------------
def dct_reference(x, dct_mat):
    input_shape = x.shape
    if x.ndim == 4:
        x = x.reshape(input_shape[0] * input_shape[3],
                      input_shape[1], input_shape[2])
    out = jnp.matmul(x, dct_mat, precision=jax.lax.Precision.HIGHEST)
    if len(input_shape) == 4:
        out = out.reshape(input_shape[0], out.shape[1], out.shape[2],
                          input_shape[3])
    return out


if __name__ == "__main__":
    key = jax.random.PRNGKey(0)

    dct_mat = make_dct_matrix(INPUT_SIZE, N_OUT, ORTHO_NORM)

    # 3-D path (docstring example shape): (10, 101, 40) -> (10, 101, 20)
    k1, k2 = jax.random.split(key)
    x3 = jax.random.normal(k1, (10, 101, INPUT_SIZE), dtype=jnp.float32)
    out3 = jax.block_until_ready(dct_forward(x3, dct_mat))
    ref3 = dct_reference(x3, dct_mat)
    assert out3.shape == (10, 101, N_OUT)
    assert jnp.allclose(out3, ref3, atol=1e-3, rtol=1e-3), "3-D mismatch vs reference"

    # 4-D path: (2, 16, 40, 3) -> (2, 16, 20, 3)
    x4 = jax.random.normal(k2, (2, 16, INPUT_SIZE, 3), dtype=jnp.float32)
    out4 = jax.block_until_ready(dct_forward(x4, dct_mat))
    ref4 = dct_reference(x4, dct_mat)
    assert out4.shape == (2, 16, N_OUT, 3)
    assert jnp.allclose(out4, ref4, atol=1e-3, rtol=1e-3), "4-D mismatch vs reference"

    print("KERNEL_OK")
</pallas_src>

<mosaic_0001>
module attributes {stable_mosaic.version = 11 : i64} {
  func.func @_dct_kernel(%arg0: i32, %arg1: memref<512x40xf32, #tpu.memory_space<vmem>>, %arg2: memref<40x20xf32, #tpu.memory_space<vmem>>, %arg3: memref<512x20xf32, #tpu.memory_space<vmem>>) attributes {dimension_semantics = [#tpu.dimension_semantics<parallel>], iteration_bounds = array<i64: 2>, scalar_prefetch = 0 : i64, scratch_operands = 0 : i64, tpu.core_type = #tpu.core_type<tc>, window_params = [{transform_indices = @transform_0, window_bounds = array<i64: 512, 40>}, {pipeline_mode = #tpu.pipeline_mode<synchronous>, transform_indices = @transform_1, window_bounds = array<i64: 40, 20>}, {transform_indices = @transform_2, window_bounds = array<i64: 512, 20>}]} {
    %c0 = arith.constant 0 : index
    %c0_0 = arith.constant 0 : index
    %0 = vector.load %arg1[%c0, %c0_0] : memref<512x40xf32, #tpu.memory_space<vmem>>, vector<512x40xf32>
    %c0_1 = arith.constant 0 : index
    %c0_2 = arith.constant 0 : index
    %1 = vector.load %arg2[%c0_1, %c0_2] : memref<40x20xf32, #tpu.memory_space<vmem>>, vector<40x20xf32>
    %cst = arith.constant dense<0.000000e+00> : vector<512x20xf32>
    %2 = tpu.matmul %0, %1, %cst {dimension_numbers = #tpu.dot_dimension_numbers<[1], [0], [0], [1], [0, 0, 1, 1], [], []>} : vector<512x40xf32>, vector<40x20xf32>, vector<512x20xf32> -> vector<512x20xf32>
    %c0_3 = arith.constant 0 : index
    %c0_4 = arith.constant 0 : index
    %3 = vector.load %arg3[%c0_3, %c0_4] : memref<512x20xf32, #tpu.memory_space<vmem>>, vector<512x20xf32>
    tpu.vector_store %arg3[%c0_3, %c0_4], %2 {strides = array<i32>} : memref<512x20xf32, #tpu.memory_space<vmem>>, vector<512x20xf32>,
    return
  }
  func.func @transform_0(%arg0: i32) -> (i32, i32) {
    %c0_i32 = arith.constant 0 : i32
    %c0_i32_0 = arith.constant 0 : i32
    return %arg0, %c0_i32 : i32, i32
  }
  func.func @transform_1(%arg0: i32) -> (i32, i32) {
    %c0_i32 = arith.constant 0 : i32
    %c0_i32_0 = arith.constant 0 : i32
    %c0_i32_1 = arith.constant 0 : i32
    return %c0_i32, %c0_i32_0 : i32, i32
  }
  func.func @transform_2(%arg0: i32) -> (i32, i32) {
    %c0_i32 = arith.constant 0 : i32
    %c0_i32_0 = arith.constant 0 : i32
    return %arg0, %c0_i32 : i32, i32
  }
}

</mosaic_0001>

<llo_original>
// kernel: tpu_custom_call.1
$region0: #{tpu_custom_call.1}
  #allocation0 [shape = 'u32[]', space=smem, size = 0x4, offset = 0x4, fixed_abs, tag = 'smem constant byte address 0x4 - core index']
  #allocation1 [shape = 'u32[144,128]{1,0:T(1,128)}', space=vmem, size = 0x12000, scoped, tag = 'internal scratch']
  %s0 = inlined_call_operand.vmem [shape: f32[1024,40], index: 0, kind: input, shape index: {}]
  %s1 = inlined_call_operand.vmem [shape: f32[40,20], index: 1, kind: input, shape index: {}]
  %s2 = inlined_call_operand.vmem [shape: f32[1024,20], index: 2, kind: output, shape index: {}]
  %s3 = sld [smem:[#allocation0]]
  $region41: #{tpu_custom_call.1} parent=0
    _
  %s5 = ssub.s32 1, %s3
  %s6 = scalar_select 0, %s5, %s3
  loop: start=0, step=1, limit=4
  $region2: #{tpu_custom_call.1} parent=0 // loop_pre_header
    _
  $region3: #{tpu_custom_call.1} parent=0 // loop_header
    %s8 = sphi 0, %s12
    %p9 = scmp.ge.s32.totalorder %s8, 4
    %s18 = sphi 0, %s20
    %s21 = sphi 0, %s18
    %s22 = sphi 0, %s21
    %s38 = sphi 0, %s22
    %s42 = sphi 0, %s42
    %s44 = sphi 0, %s42
    %s45 = sphi 0, %s44
    %s59 = sphi 0, %s45
    %s65 = sphi 0, %s67
    %s68 = sphi 0, %s65
    %s69 = sphi 0, %s68
    %s85 = sphi 0, %s69
  $region4: #{tpu_custom_call.1} parent=0 // loop_header_branch
    %11 = sbr.rel (%p9) target = $region8
  $region5: #{tpu_custom_call.1} parent=0 // loop_body
    %s13 = ssub.s32 %s8, 1
    %s14 = ssub.s32 %s8, 2
    %s15 = sadd.s32 %s8, 1
    %s16 = ssub.s32 %s8, %s15
    %p17 = scmp.eq.s32.totalorder %s16, 0
    %s19 = sadd.s32 %s18, 1
    %s20 = scalar_select %p17, %s18, %s19
    %p23 = pneg %p17
    %p24 = scmp.eq.s32.totalorder %s8, 1
    %p25 = por %p23, %p24
    %p26 = scmp.ne.s32.totalorder %s18, %s21
    %p27 = scmp.eq.s32.totalorder %s8, 0
    %p28 = por %p26, %p27
    %p29 = scmp.ne.s32.totalorder %s18, %s21
    %p30 = scmp.eq.s32.totalorder %s13, 1
    %p31 = por %p29, %p30
    %p32 = scmp.ne.s32.totalorder %s21, %s22
    %p33 = scmp.eq.s32.totalorder %s13, 0
    %p34 = por %p32, %p33
    %p35 = scmp.ne.s32.totalorder %s21, %s22
    %p36 = scmp.eq.s32.totalorder %s14, 1
    %p37 = por %p35, %p36
    %p39 = scmp.ne.s32.totalorder %s22, %s38
    %p40 = scmp.eq.s32.totalorder %s14, 0
    %p41 = por %p39, %p40
    %s43 = sadd.s32 %s42, 1
    %p46 = scmp.eq.s32.totalorder %s8, 1
    %p47 = scmp.ne.s32.totalorder %s42, %s44
    %p48 = scmp.eq.s32.totalorder %s8, 0
    %p49 = por %p47, %p48
    %p50 = scmp.ne.s32.totalorder %s42, %s44
    %p51 = scmp.eq.s32.totalorder %s13, 1
    %p52 = por %p50, %p51
    %p53 = scmp.ne.s32.totalorder %s44, %s45
    %p54 = scmp.eq.s32.totalorder %s13, 0
    %p55 = por %p53, %p54
    %p56 = scmp.ne.s32.totalorder %s44, %s45
    %p57 = scmp.eq.s32.totalorder %s14, 1
    %p58 = por %p56, %p57
    %p60 = scmp.ne.s32.totalorder %s45, %s59
    %p61 = scmp.eq.s32.totalorder %s14, 0
    %p62 = por %p60, %p61
    %s63 = ssub.s32 %s8, %s15
    %p64 = scmp.eq.s32.totalorder %s63, 0
    %s66 = sadd.s32 %s65, 1
    %s67 = scalar_select %p64, %s65, %s66
    %p70 = pneg %p64
    %p71 = scmp.eq.s32.totalorder %s8, 1
    %p72 = por %p70, %p71
    %p73 = scmp.ne.s32.totalorder %s65, %s68
    %p74 = scmp.eq.s32.totalorder %s8, 0
    %p75 = por %p73, %p74
    %p76 = scmp.ne.s32.totalorder %s65, %s68
    %p77 = scmp.eq.s32.totalorder %s13, 1
    %p78 = por %p76, %p77
    %p79 = scmp.ne.s32.totalorder %s68, %s69
    %p80 = scmp.eq.s32.totalorder %s13, 0
    %p81 = por %p79, %p80
    %p82 = scmp.ne.s32.totalorder %s68, %s69
    %p83 = scmp.eq.s32.totalorder %s14, 1
    %p84 = por %p82, %p83
    %p86 = scmp.ne.s32.totalorder %s69, %s85
    %p87 = scmp.eq.s32.totalorder %s14, 0
    %p88 = por %p86, %p87
    %p89 = scmp.le.s32.totalorder 1, %s8
    %p90 = scmp.lt.s32.totalorder %s8, 3
    %p91 = pnand %p89, %p90
    %p92 = pneg %p91
    // Predicated region
    $region9: #{tpu_custom_call.1} parent=5 // pred_check
      _
    $region10: #{tpu_custom_call.1} parent=5 // pred_check_branch
      %94 = sbr.rel (%p91) target = $region12
    $region11: #{tpu_custom_call.1} parent=5 // pred_region
      %s95 = ssub.s32 %s8, 1
      // Predicated region
      $region13: #{tpu_custom_call.1} parent=11 // pred_check
        %p96 = pneg %p55
      $region14: #{tpu_custom_call.1} parent=11 // pred_check_branch
        %98 = sbr.rel (%p96) target = $region16
      $region15: #{tpu_custom_call.1} parent=11 // pred_region
        _
      $region16: #{tpu_custom_call.1} parent=11 // pred_fallthru
        _
    $region12: #{tpu_custom_call.1} parent=5 // pred_fallthru
      _
    %p99 = scmp.lt.s32.totalorder %s8, 2
    // Predicated region
    $region17: #{tpu_custom_call.1} parent=5 // pred_check
      %p100 = pneg %p99
    $region18: #{tpu_custom_call.1} parent=5 // pred_check_branch
      %102 = sbr.rel (%p100) target = $region20
    $region19: #{tpu_custom_call.1} parent=5 // pred_region
      // Predicated region
      $region21: #{tpu_custom_call.1} parent=19 // pred_check
        %p103 = pneg %p28
      $region22: #{tpu_custom_call.1} parent=19 // pred_check_branch
        %105 = sbr.rel (%p103) target = $region24
      $region23: #{tpu_custom_call.1} parent=19 // pred_region
        %s106 = smul.u32 64, %s8
        %p107 = scmp.lt.s32.totalorder %s106, 127
        %s108 = scalar_select %p107, %s106, 127
        %s109 = smul.addr %s108, 8
        %s110 = scalar_lea.vmem %s0, %s109
        %s111 = smul.u32 64, %s8
      $region24: #{tpu_custom_call.1} parent=19 // pred_fallthru
        _
    $region20: #{tpu_custom_call.1} parent=5 // pred_fallthru
      _
    %p112 = scmp.le.s32.totalorder 1, %s8
    %p113 = scmp.lt.s32.totalorder %s8, 3
    %p114 = pnand %p112, %p113
    %p115 = pneg %p114
    // Predicated region
    $region25: #{tpu_custom_call.1} parent=5 // pred_check
      _
    $region26: #{tpu_custom_call.1} parent=5 // pred_check_branch
      %117 = sbr.rel (%p114) target = $region28
    $region27: #{tpu_custom_call.1} parent=5 // pred_region
      %s118 = ssub.s32 %s8, 1
      %s119 = smul.u32 64, %s13
      %p120 = scmp.lt.s32.totalorder %s119, 127
      %s121 = scalar_select %p120, %s119, 127
      %s122 = smul.addr %s121, 8
      %s123 = scalar_lea.vmem %s0, %s122
      %p124 = pneg %p34
      %p125 = pneg %p31
      %p126 = pneg %p55
      %p127 = pneg %p52
      %p128 = pneg %p81
      %p129 = pneg %p78
      %s130 = smul.u32 64, %s13
      %p131 = scmp.lt.s32.totalorder %s130, 127
      %s132 = scalar_select %p131, %s130, 127
      %s133 = smul.addr %s132, 8
      %s134 = scalar_lea.vmem %s2, %s133
      %s135 = smul.u32 64, %s13
      %p136 = scmp.lt.s32.totalorder %s135, 127
      %s137 = scalar_select %p136, %s135, 127
      %s138 = smul.addr %s137, 8
      %s139 = scalar_lea.vmem %s0, %s138
      %s140 = smul.u32 64, %s13
      %s141 = smul.u32 64, %s13
      %p142 = scmp.lt.s32.totalorder %s141, 127
      %s143 = scalar_select %p142, %s141, 127
      %s144 = smul.addr %s143, 8
      %s145 = scalar_lea.vmem %s2, %s144
      %s146 = smul.u32 64, %s13
      %v147 = vld [vmem:[%s139] sm:$0xff]
      %v148 = vld [vmem:[%s139 + $0x8] sm:$0xff]
      %v149 = vld [vmem:[%s139 + $0x10] sm:$0xff]
      %v150 = vld [vmem:[%s139 + $0x18] sm:$0xff]
      %v151 = vld [vmem:[%s139 + $0x20] sm:$0xff]
      %v152 = vld [vmem:[%s139 + $0x28] sm:$0xff]
      %v153 = vld [vmem:[%s139 + $0x30] sm:$0xff]
      %v154 = vld [vmem:[%s139 + $0x38] sm:$0xff]
      %v155 = vld [vmem:[%s139 + $0x40] sm:$0xff]
      %v156 = vld [vmem:[%s139 + $0x48] sm:$0xff]
      %v157 = vld [vmem:[%s139 + $0x50] sm:$0xff]
      %v158 = vld [vmem:[%s139 + $0x58] sm:$0xff]
      %v159 = vld [vmem:[%s139 + $0x60] sm:$0xff]
      %v160 = vld [vmem:[%s139 + $0x68] sm:$0xff]
      %v161 = vld [vmem:[%s139 + $0x70] sm:$0xff]
      %v162 = vld [vmem:[%s139 + $0x78] sm:$0xff]
      %v163 = vld [vmem:[%s139 + $0x80] sm:$0xff]
      %v164 = vld [vmem:[%s139 + $0x88] sm:$0xff]
      %v165 = vld [vmem:[%s139 + $0x90] sm:$0xff]
      %v166 = vld [vmem:[%s139 + $0x98] sm:$0xff]
      %v167 = vld [vmem:[%s139 + $0xa0] sm:$0xff]
      %v168 = vld [vmem:[%s139 + $0xa8] sm:$0xff]
      %v169 = vld [vmem:[%s139 + $0xb0] sm:$0xff]
      %v170 = vld [vmem:[%s139 + $0xb8] sm:$0xff]
      %v171 = vld [vmem:[%s139 + $0xc0] sm:$0xff]
      %v172 = vld [vmem:[%s139 + $0xc8] sm:$0xff]
      %v173 = vld [vmem:[%s139 + $0xd0] sm:$0xff]
      %v174 = vld [vmem:[%s139 + $0xd8] sm:$0xff]
      %v175 = vld [vmem:[%s139 + $0xe0] sm:$0xff]
      %v176 = vld [vmem:[%s139 + $0xe8] sm:$0xff]
      %v177 = vld [vmem:[%s139 + $0xf0] sm:$0xff]
      %v178 = vld [vmem:[%s139 + $0xf8] sm:$0xff]
      %v179 = vld [vmem:[%s139 + $0x100] sm:$0xff]
      %v180 = vld [vmem:[%s139 + $0x108] sm:$0xff]
      %v181 = vld [vmem:[%s139 + $0x110] sm:$0xff]
      %v182 = vld [vmem:[%s139 + $0x118] sm:$0xff]
      %v183 = vld [vmem:[%s139 + $0x120] sm:$0xff]
      %v184 = vld [vmem:[%s139 + $0x128] sm:$0xff]
      %v185 = vld [vmem:[%s139 + $0x130] sm:$0xff]
      %v186 = vld [vmem:[%s139 + $0x138] sm:$0xff]
      %v187 = vld [vmem:[%s139 + $0x140] sm:$0xff]
      %v188 = vld [vmem:[%s139 + $0x148] sm:$0xff]
      %v189 = vld [vmem:[%s139 + $0x150] sm:$0xff]
      %v190 = vld [vmem:[%s139 + $0x158] sm:$0xff]
      %v191 = vld [vmem:[%s139 + $0x160] sm:$0xff]
      %v192 = vld [vmem:[%s139 + $0x168] sm:$0xff]
      %v193 = vld [vmem:[%s139 + $0x170] sm:$0xff]
      %v194 = vld [vmem:[%s139 + $0x178] sm:$0xff]
      %v195 = vld [vmem:[%s139 + $0x180] sm:$0xff]
      %v196 = vld [vmem:[%s139 + $0x188] sm:$0xff]
      %v197 = vld [vmem:[%s139 + $0x190] sm:$0xff]
      %v198 = vld [vmem:[%s139 + $0x198] sm:$0xff]
      %v199 = vld [vmem:[%s139 + $0x1a0] sm:$0xff]
      %v200 = vld [vmem:[%s139 + $0x1a8] sm:$0xff]
      %v201 = vld [vmem:[%s139 + $0x1b0] sm:$0xff]
      %v202 = vld [vmem:[%s139 + $0x1b8] sm:$0xff]
      %v203 = vld [vmem:[%s139 + $0x1c0] sm:$0xff]
      %v204 = vld [vmem:[%s139 + $0x1c8] sm:$0xff]
      %v205 = vld [vmem:[%s139 + $0x1d0] sm:$0xff]
      %v206 = vld [vmem:[%s139 + $0x1d8] sm:$0xff]
      %v207 = vld [vmem:[%s139 + $0x1e0] sm:$0xff]
      %v208 = vld [vmem:[%s139 + $0x1e8] sm:$0xff]
      %v209 = vld [vmem:[%s139 + $0x1f0] sm:$0xff]
      %v210 = vld [vmem:[%s139 + $0x1f8] sm:$0xff]
      %v211 = vld [vmem:[%s1] sm:$0xff]
      %v212 = vld [vmem:[%s1 + $0x8] sm:$0xff]
      %v213 = vld [vmem:[%s1 + $0x10] sm:$0xff]
      %v214 = vld [vmem:[%s1 + $0x18] sm:$0xff]
      %v215 = vld [vmem:[%s1 + $0x20] sm:$0xff]
      %vm216 = vcmask 326656
      %v218 = vsel %vm216, %v147, 0
      %v221 = vsel %vm216, %v148, 0
      %v224 = vsel %vm216, %v149, 0
      %v227 = vsel %vm216, %v150, 0
      %v230 = vsel %vm216, %v151, 0
      %v233 = vsel %vm216, %v152, 0
      %v236 = vsel %vm216, %v153, 0
      %v239 = vsel %vm216, %v154, 0
      %v242 = vsel %vm216, %v155, 0
      %v245 = vsel %vm216, %v156, 0
      %v248 = vsel %vm216, %v157, 0
      %v251 = vsel %vm216, %v158, 0
      %v254 = vsel %vm216, %v159, 0
      %v257 = vsel %vm216, %v160, 0
      %v260 = vsel %vm216, %v161, 0
      %v263 = vsel %vm216, %v162, 0
      %v266 = vsel %vm216, %v163, 0
      %v269 = vsel %vm216, %v164, 0
      %v272 = vsel %vm216, %v165, 0
      %v275 = vsel %vm216, %v166, 0
      %v278 = vsel %vm216, %v167, 0
      %v281 = vsel %vm216, %v168, 0
      %v284 = vsel %vm216, %v169, 0
      %v287 = vsel %vm216, %v170, 0
      %v290 = vsel %vm216, %v171, 0
      %v293 = vsel %vm216, %v172, 0
      %v296 = vsel %vm216, %v173, 0
      %v299 = vsel %vm216, %v174, 0
      %v302 = vsel %vm216, %v175, 0
      %v305 = vsel %vm216, %v176, 0
      %v308 = vsel %vm216, %v177, 0
      %v311 = vsel %vm216, %v178, 0
      %v314 = vsel %vm216, %v179, 0
      %v317 = vsel %vm216, %v180, 0
      %v320 = vsel %vm216, %v181, 0
      %v323 = vsel %vm216, %v182, 0
      %v326 = vsel %vm216, %v183, 0
      %v329 = vsel %vm216, %v184, 0
      %v332 = vsel %vm216, %v185, 0
      %v335 = vsel %vm216, %v186, 0
      %v338 = vsel %vm216, %v187, 0
      %v341 = vsel %vm216, %v188, 0
      %v344 = vsel %vm216, %v189, 0
      %v347 = vsel %vm216, %v190, 0
      %v350 = vsel %vm216, %v191, 0
      %v353 = vsel %vm216, %v192, 0
      %v356 = vsel %vm216, %v193, 0
      %v359 = vsel %vm216, %v194, 0
      %v362 = vsel %vm216, %v195, 0
      %v365 = vsel %vm216, %v196, 0
      %v368 = vsel %vm216, %v197, 0
      %v371 = vsel %vm216, %v198, 0
      %v374 = vsel %vm216, %v199, 0
      %v377 = vsel %vm216, %v200, 0
      %v380 = vsel %vm216, %v201, 0
      %v383 = vsel %vm216, %v202, 0
      %v386 = vsel %vm216, %v203, 0
      %v389 = vsel %vm216, %v204, 0
      %v392 = vsel %vm216, %v205, 0
      %v395 = vsel %vm216, %v206, 0
      %v398 = vsel %vm216, %v207, 0
      %v401 = vsel %vm216, %v208, 0
      %v404 = vsel %vm216, %v209, 0
      %v407 = vsel %vm216, %v210, 0
      %409 = vmatprep.subr.mxu0 0.0
      %410 = vmatpush1.msra.mxu0 %v211
      %411 = vmatprep.subr.mxu0 0.0
      %412 = vmatpush1.msra.mxu0 %v212
      %413 = vmatprep.subr.mxu0 0.0
      %414 = vmatpush1.msra.mxu0 %v213
      %415 = vmatprep.subr.mxu0 0.0
      %416 = vmatpush1.msra.mxu0 %v214
      %417 = vmatprep.subr.mxu0 0.0
      %418 = vmatpush1.msra.mxu0 %v215
      %419 = vmatprep.subr.mxu0 0.0
      %420 = vmatpush1.msra.mxu0 0.0
      %421 = vmatprep.subr.mxu0 0.0
      %422 = vmatpush1.msra.mxu0 0.0
      %423 = vmatprep.subr.mxu0 0.0
      %424 = vmatpush1.msra.mxu0 0.0
      %425 = vmatprep.subr.mxu0 0.0
      %426 = vmatpush1.msra.mxu0 0.0
      %427 = vmatprep.subr.mxu0 0.0
      %428 = vmatpush1.msra.mxu0 0.0
      %429 = vmatprep.subr.mxu0 0.0
      %430 = vmatpush1.msra.mxu0 0.0
      %431 = vmatprep.subr.mxu0 0.0
      %432 = vmatpush1.msra.mxu0 0.0
      %433 = vmatprep.subr.mxu0 0.0
      %434 = vmatpush1.msra.mxu0 0.0
      %435 = vmatprep.subr.mxu0 0.0
      %436 = vmatpush1.msra.mxu0 0.0
      %437 = vmatprep.subr.mxu0 0.0
      %438 = vmatpush1.msra.mxu0 0.0
      %439 = vmatprep.subr.mxu0 0.0
      %440 = vmatpush1.msra.mxu0 0.0
      %441 = vmatprep.subr.mxu0 0.0
      %442 = vmatpush1.msra.mxu0 0.0
      %443 = vmatprep.subr.mxu0 0.0
      %444 = vmatpush1.msra.mxu0 0.0
      %445 = vmatprep.subr.mxu0 0.0
      %446 = vmatpush1.msra.mxu0 0.0
      %447 = vmatprep.subr.mxu0 0.0
      %448 = vmatpush1.msra.mxu0 0.0
      %449 = vmatprep.subr.mxu0 0.0
      %450 = vmatpush1.msra.mxu0 0.0
      %451 = vmatprep.subr.mxu0 0.0
      %452 = vmatpush1.msra.mxu0 0.0
      %453 = vmatprep.subr.mxu0 0.0
      %454 = vmatpush1.msra.mxu0 0.0
      %455 = vmatprep.subr.mxu0 0.0
      %456 = vmatpush1.msra.mxu0 0.0
      %457 = vmatprep.subr.mxu0 0.0
      %458 = vmatpush1.msra.mxu0 0.0
      %459 = vmatprep.subr.mxu0 0.0
      %460 = vmatpush1.msra.mxu0 0.0
      %461 = vmatprep.subr.mxu0 0.0
      %462 = vmatpush1.msra.mxu0 0.0
      %463 = vmatprep.subr.mxu0 0.0
      %464 = vmatpush1.msra.mxu0 0.0
      %465 = vmatprep.subr.mxu0 0.0
      %466 = vmatpush1.msra.mxu0 0.0
      %467 = vmatprep.subr.mxu0 0.0
      %468 = vmatpush1.msra.mxu0 0.0
      %469 = vmatprep.subr.mxu0 0.0
      %470 = vmatpush1.msra.mxu0 0.0
      %471 = vmatprep.subr.mxu0 0.0
      %472 = vmatpush1.msra.mxu0 0.0
      %473 = vmatprep.mubr.f32.mxu0 0.0
      %474 = vmatmul.mubr.f32.gmra.mrb[0].mxu0 %v218
      %v475 = vpop.f32.mrb[0].mxu0
      %v476 = vadd.f32 0.0, %v475
      %v477 = vpop.f32.mrb[0].mxu0
      %478 = vmatprep.mubr.f32.mxu0 0.0
      %479 = vmatmul.mubr.f32.gmra.mrb[0].mxu0 %v221
      %v480 = vpop.f32.mrb[0].mxu0
      %v481 = vadd.f32 0.0, %v480
      %v482 = vpop.f32.mrb[0].mxu0
      %483 = vmatprep.mubr.f32.mxu0 0.0
      %484 = vmatmul.mubr.f32.gmra.mrb[0].mxu0 %v224
      %v485 = vpop.f32.mrb[0].mxu0
      %v486 = vadd.f32 0.0, %v485
      %v487 = vpop.f32.mrb[0].mxu0
      %488 = vmatprep.mubr.f32.mxu0 0.0
      %489 = vmatmul.mubr.f32.gmra.mrb[0].mxu0 %v227
      %v490 = vpop.f32.mrb[0].mxu0
      %v491 = vadd.f32 0.0, %v490
      %v492 = vpop.f32.mrb[0].mxu0
      %493 = vmatprep.mubr.f32.mxu0 0.0
      %494 = vmatmul.mubr.f32.gmra.mrb[0].mxu0 %v230
      %v495 = vpop.f32.mrb[0].mxu0
      %v496 = vadd.f32 0.0, %v495
      %v497 = vpop.f32.mrb[0].mxu0
      %498 = vmatprep.mubr.f32.mxu0 0.0
      %499 = vmatmul.mubr.f32.gmra.mrb[0].mxu0 %v233
      %v500 = vpop.f32.mrb[0].mxu0
      %v501 = vadd.f32 0.0, %v500
      %v502 = vpop.f32.mrb[0].mxu0
      %503 = vmatprep.mubr.f32.mxu0 0.0
      %504 = vmatmul.mubr.f32.gmra.mrb[0].mxu0 %v236
      %v505 = vpop.f32.mrb[0].mxu0
      %v506 = vadd.f32 0.0, %v505
      %v507 = vpop.f32.mrb[0].mxu0
      %508 = vmatprep.mubr.f32.mxu0 0.0
      %509 = vmatmul.mubr.f32.gmra.mrb[0].mxu0 %v239
      %v510 = vpop.f32.mrb[0].mxu0
      %v511 = vadd.f32 0.0, %v510
      %v512 = vpop.f32.mrb[0].mxu0
      %513 = vmatprep.mubr.f32.mxu0 0.0
      %514 = vmatmul.mubr.f32.gmra.mrb[0].mxu0 %v242
      %v515 = vpop.f32.mrb[0].mxu0
      %v516 = vadd.f32 0.0, %v515
      %v517 = vpop.f32.mrb[0].mxu0
      %518 = vmatprep.mubr.f32.mxu0 0.0
      %519 = vmatmul.mubr.f32.gmra.mrb[0].mxu0 %v245
      %v520 = vpop.f32.mrb[0].mxu0
      %v521 = vadd.f32 0.0, %v520
      %v522 = vpop.f32.mrb[0].mxu0
      %523 = vmatprep.mubr.f32.mxu0 0.0
      %524 = vmatmul.mubr.f32.gmra.mrb[0].mxu0 %v248
      %v525 = vpop.f32.mrb[0].mxu0
      %v526 = vadd.f32 0.0, %v525
      %v527 = vpop.f32.mrb[0].mxu0
      %528 = vmatprep.mubr.f32.mxu0 0.0
      %529 = vmatmul.mubr.f32.gmra.mrb[0].mxu0 %v251
      %v530 = vpop.f32.mrb[0].mxu0
      %v531 = vadd.f32 0.0, %v530
      %v532 = vpop.f32.mrb[0].mxu0
      %533 = vmatprep.mubr.f32.mxu0 0.0
      %534 = vmatmul.mubr.f32.gmra.mrb[0].mxu0 %v254
      %v535 = vpop.f32.mrb[0].mxu0
      %v536 = vadd.f32 0.0, %v535
      %v537 = vpop.f32.mrb[0].mxu0
      %538 = vmatprep.mubr.f32.mxu0 0.0
      %539 = vmatmul.mubr.f32.gmra.mrb[0].mxu0 %v257
      %v540 = vpop.f32.mrb[0].mxu0
      %v541 = vadd.f32 0.0, %v540
      %v542 = vpop.f32.mrb[0].mxu0
      %543 = vmatprep.mubr.f32.mxu0 0.0
      %544 = vmatmul.mubr.f32.gmra.mrb[0].mxu0 %v260
      %v545 = vpop.f32.mrb[0].mxu0
      %v546 = vadd.f32 0.0, %v545
      %v547 = vpop.f32.mrb[0].mxu0
      %548 = vmatprep.mubr.f32.mxu0 0.0
      %549 = vmatmul.mubr.f32.gmra.mrb[0].mxu0 %v263
      %v550 = vpop.f32.mrb[0].mxu0
      %v551 = vadd.f32 0.0, %v550
      %v552 = vpop.f32.mrb[0].mxu0
      %553 = vmatprep.mubr.f32.mxu0 0.0
      %554 = vmatmul.mubr.f32.gmra.mrb[0].mxu0 %v266
      %v555 = vpop.f32.mrb[0].mxu0
      %v556 = vadd.f32 0.0, %v555
      %v557 = vpop.f32.mrb[0].mxu0
      %558 = vmatprep.mubr.f32.mxu0 0.0
      %559 = vmatmul.mubr.f32.gmra.mrb[0].mxu0 %v269
      %v560 = vpop.f32.mrb[0].mxu0
      %v561 = vadd.f32 0.0, %v560
      %v562 = vpop.f32.mrb[0].mxu0
      %563 = vmatprep.mubr.f32.mxu0 0.0
      %564 = vmatmul.mubr.f32.gmra.mrb[0].mxu0 %v272
      %v565 = vpop.f32.mrb[0].mxu0
      %v566 = vadd.f32 0.0, %v565
      %v567 = vpop.f32.mrb[0].mxu0
      %568 = vmatprep.mubr.f32.mxu0 0.0
      %569 = vmatmul.mubr.f32.gmra.mrb[0].mxu0 %v275
      %v570 = vpop.f32.mrb[0].mxu0
      %v571 = vadd.f32 0.0, %v570
      %v572 = vpop.f32.mrb[0].mxu0
      %573 = vmatprep.mubr.f32.mxu0 0.0
      %574 = vmatmul.mubr.f32.gmra.mrb[0].mxu0 %v278
      %v575 = vpop.f32.mrb[0].mxu0
      %v576 = vadd.f32 0.0, %v575
      %v577 = vpop.f32.mrb[0].mxu0
      %578 = vmatprep.mubr.f32.mxu0 0.0
      %579 = vmatmul.mubr.f32.gmra.mrb[0].mxu0 %v281
      %v580 = vpop.f32.mrb[0].mxu0
      %v581 = vadd.f32 0.0, %v580
      %v582 = vpop.f32.mrb[0].mxu0
      %583 = vmatprep.mubr.f32.mxu0 0.0
      %584 = vmatmul.mubr.f32.gmra.mrb[0].mxu0 %v284
      %v585 = vpop.f32.mrb[0].mxu0
      %v586 = vadd.f32 0.0, %v585
      %v587 = vpop.f32.mrb[0].mxu0
      %588 = vmatprep.mubr.f32.mxu0 0.0
      %589 = vmatmul.mubr.f32.gmra.mrb[0].mxu0 %v287
      %v590 = vpop.f32.mrb[0].mxu0
      %v591 = vadd.f32 0.0, %v590
      %v592 = vpop.f32.mrb[0].mxu0
      %593 = vmatprep.mubr.f32.mxu0 0.0
      %594 = vmatmul.mubr.f32.gmra.mrb[0].mxu0 %v290
      %v595 = vpop.f32.mrb[0].mxu0
      %v596 = vadd.f32 0.0, %v595
      %v597 = vpop.f32.mrb[0].mxu0
      %598 = vmatprep.mubr.f32.mxu0 0.0
      %599 = vmatmul.mubr.f32.gmra.mrb[0].mxu0 %v293
      %v600 = vpop.f32.mrb[0].mxu0
      %v601 = vadd.f32 0.0, %v600
      %v602 = vpop.f32.mrb[0].mxu0
      %603 = vmatprep.mubr.f32.mxu0 0.0
      %604 = vmatmul.mubr.f32.gmra.mrb[0].mxu0 %v296
      %v605 = vpop.f32.mrb[0].mxu0
      %v606 = vadd.f32 0.0, %v605
      %v607 = vpop.f32.mrb[0].mxu0
      %608 = vmatprep.mubr.f32.mxu0 0.0
      %609 = vmatmul.mubr.f32.gmra.mrb[0].mxu0 %v299
      %v610 = vpop.f32.mrb[0].mxu0
      %v611 = vadd.f32 0.0, %v610
      %v612 = vpop.f32.mrb[0].mxu0
      %613 = vmatprep.mubr.f32.mxu0 0.0
      %614 = vmatmul.mubr.f32.gmra.mrb[0].mxu0 %v302
      %v615 = vpop.f32.mrb[0].mxu0
      %v616 = vadd.f32 0.0, %v615
      %v617 = vpop.f32.mrb[0].mxu0
      %618 = vmatprep.mubr.f32.mxu0 0.0
      %619 = vmatmul.mubr.f32.gmra.mrb[0].mxu0 %v305
      %v620 = vpop.f32.mrb[0].mxu0
      %v621 = vadd.f32 0.0, %v620
      %v622 = vpop.f32.mrb[0].mxu0
      %623 = vmatprep.mubr.f32.mxu0 0.0
      %624 = vmatmul.mubr.f32.gmra.mrb[0].mxu0 %v308
      %v625 = vpop.f32.mrb[0].mxu0
      %v626 = vadd.f32 0.0, %v625
      %v627 = vpop.f32.mrb[0].mxu0
      %628 = vmatprep.mubr.f32.mxu0 0.0
      %629 = vmatmul.mubr.f32.gmra.mrb[0].mxu0 %v311
      %v630 = vpop.f32.mrb[0].mxu0
      %v631 = vadd.f32 0.0, %v630
      %v632 = vpop.f32.mrb[0].mxu0
      %633 = vmatprep.mubr.f32.mxu0 0.0
      %634 = vmatmul.mubr.f32.gmra.mrb[0].mxu0 %v314
      %v635 = vpop.f32.mrb[0].mxu0
      %v636 = vadd.f32 0.0, %v635
      %v637 = vpop.f32.mrb[0].mxu0
      %638 = vmatprep.mubr.f32.mxu0 0.0
      %639 = vmatmul.mubr.f32.gmra.mrb[0].mxu0 %v317
      %v640 = vpop.f32.mrb[0].mxu0
      %v641 = vadd.f32 0.0, %v640
      %v642 = vpop.f32.mrb[0].mxu0
      %643 = vmatprep.mubr.f32.mxu0 0.0
      %644 = vmatmul.mubr.f32.gmra.mrb[0].mxu0 %v320
      %v645 = vpop.f32.mrb[0].mxu0
      %v646 = vadd.f32 0.0, %v645
      %v647 = vpop.f32.mrb[0].mxu0
      %648 = vmatprep.mubr.f32.mxu0 0.0
      %649 = vmatmul.mubr.f32.gmra.mrb[0].mxu0 %v323
      %v650 = vpop.f32.mrb[0].mxu0
      %v651 = vadd.f32 0.0, %v650
      %v652 = vpop.f32.mrb[0].mxu0
      %653 = vmatprep.mubr.f32.mxu0 0.0
      %654 = vmatmul.mubr.f32.gmra.mrb[0].mxu0 %v326
      %v655 = vpop.f32.mrb[0].mxu0
      %v656 = vadd.f32 0.0, %v655
      %v657 = vpop.f32.mrb[0].mxu0
      %658 = vmatprep.mubr.f32.mxu0 0.0
      %659 = vmatmul.mubr.f32.gmra.mrb[0].mxu0 %v329
      %v660 = vpop.f32.mrb[0].mxu0
      %v661 = vadd.f32 0.0, %v660
      %v662 = vpop.f32.mrb[0].mxu0
      %663 = vmatprep.mubr.f32.mxu0 0.0
      %664 = vmatmul.mubr.f32.gmra.mrb[0].mxu0 %v332
      %v665 = vpop.f32.mrb[0].mxu0
      %v666 = vadd.f32 0.0, %v665
      %v667 = vpop.f32.mrb[0].mxu0
      %668 = vmatprep.mubr.f32.mxu0 0.0
      %669 = vmatmul.mubr.f32.gmra.mrb[0].mxu0 %v335
      %v670 = vpop.f32.mrb[0].mxu0
      %v671 = vadd.f32 0.0, %v670
      %v672 = vpop.f32.mrb[0].mxu0
      %673 = vmatprep.mubr.f32.mxu0 0.0
      %674 = vmatmul.mubr.f32.gmra.mrb[0].mxu0 %v338
      %v675 = vpop.f32.mrb[0].mxu0
      %v676 = vadd.f32 0.0, %v675
      %v677 = vpop.f32.mrb[0].mxu0
      %678 = vmatprep.mubr.f32.mxu0 0.0
      %679 = vmatmul.mubr.f32.gmra.mrb[0].mxu0 %v341
      %v680 = vpop.f32.mrb[0].mxu0
      %v681 = vadd.f32 0.0, %v680
      %v682 = vpop.f32.mrb[0].mxu0
      %683 = vmatprep.mubr.f32.mxu0 0.0
      %684 = vmatmul.mubr.f32.gmra.mrb[0].mxu0 %v344
      %v685 = vpop.f32.mrb[0].mxu0
      %v686 = vadd.f32 0.0, %v685
      %v687 = vpop.f32.mrb[0].mxu0
      %688 = vmatprep.mubr.f32.mxu0 0.0
      %689 = vmatmul.mubr.f32.gmra.mrb[0].mxu0 %v347
      %v690 = vpop.f32.mrb[0].mxu0
      %v691 = vadd.f32 0.0, %v690
      %v692 = vpop.f32.mrb[0].mxu0
      %693 = vmatprep.mubr.f32.mxu0 0.0
      %694 = vmatmul.mubr.f32.gmra.mrb[0].mxu0 %v350
      %v695 = vpop.f32.mrb[0].mxu0
      %v696 = vadd.f32 0.0, %v695
      %v697 = vpop.f32.mrb[0].mxu0
      %698 = vmatprep.mubr.f32.mxu0 0.0
      %699 = vmatmul.mubr.f32.gmra.mrb[0].mxu0 %v353
      %v700 = vpop.f32.mrb[0].mxu0
      %v701 = vadd.f32 0.0, %v700
      %v702 = vpop.f32.mrb[0].mxu0
      %703 = vmatprep.mubr.f32.mxu0 0.0
      %704 = vmatmul.mubr.f32.gmra.mrb[0].mxu0 %v356
      %v705 = vpop.f32.mrb[0].mxu0
      %v706 = vadd.f32 0.0, %v705
      %v707 = vpop.f32.mrb[0].mxu0
      %708 = vmatprep.mubr.f32.mxu0 0.0
      %709 = vmatmul.mubr.f32.gmra.mrb[0].mxu0 %v359
      %v710 = vpop.f32.mrb[0].mxu0
      %v711 = vadd.f32 0.0, %v710
      %v712 = vpop.f32.mrb[0].mxu0
      %713 = vmatprep.mubr.f32.mxu0 0.0
      %714 = vmatmul.mubr.f32.gmra.mrb[0].mxu0 %v362
      %v715 = vpop.f32.mrb[0].mxu0
      %v716 = vadd.f32 0.0, %v715
      %v717 = vpop.f32.mrb[0].mxu0
      %718 = vmatprep.mubr.f32.mxu0 0.0
      %719 = vmatmul.mubr.f32.gmra.mrb[0].mxu0 %v365
      %v720 = vpop.f32.mrb[0].mxu0
      %v721 = vadd.f32 0.0, %v720
      %v722 = vpop.f32.mrb[0].mxu0
      %723 = vmatprep.mubr.f32.mxu0 0.0
      %724 = vmatmul.mubr.f32.gmra.mrb[0].mxu0 %v368
      %v725 = vpop.f32.mrb[0].mxu0
      %v726 = vadd.f32 0.0, %v725
      %v727 = vpop.f32.mrb[0].mxu0
      %728 = vmatprep.mubr.f32.mxu0 0.0
      %729 = vmatmul.mubr.f32.gmra.mrb[0].mxu0 %v371
      %v730 = vpop.f32.mrb[0].mxu0
      %v731 = vadd.f32 0.0, %v730
      %v732 = vpop.f32.mrb[0].mxu0
      %733 = vmatprep.mubr.f32.mxu0 0.0
      %734 = vmatmul.mubr.f32.gmra.mrb[0].mxu0 %v374
      %v735 = vpop.f32.mrb[0].mxu0
      %v736 = vadd.f32 0.0, %v735
      %v737 = vpop.f32.mrb[0].mxu0
      %738 = vmatprep.mubr.f32.mxu0 0.0
      %739 = vmatmul.mubr.f32.gmra.mrb[0].mxu0 %v377
      %v740 = vpop.f32.mrb[0].mxu0
      %v741 = vadd.f32 0.0, %v740
      %v742 = vpop.f32.mrb[0].mxu0
      %743 = vmatprep.mubr.f32.mxu0 0.0
      %744 = vmatmul.mubr.f32.gmra.mrb[0].mxu0 %v380
      %v745 = vpop.f32.mrb[0].mxu0
      %v746 = vadd.f32 0.0, %v745
      %v747 = vpop.f32.mrb[0].mxu0
      %748 = vmatprep.mubr.f32.mxu0 0.0
      %749 = vmatmul.mubr.f32.gmra.mrb[0].mxu0 %v383
      %v750 = vpop.f32.mrb[0].mxu0
      %v751 = vadd.f32 0.0, %v750
      %v752 = vpop.f32.mrb[0].mxu0
      %753 = vmatprep.mubr.f32.mxu0 0.0
      %754 = vmatmul.mubr.f32.gmra.mrb[0].mxu0 %v386
      %v755 = vpop.f32.mrb[0].mxu0
      %v756 = vadd.f32 0.0, %v755
      %v757 = vpop.f32.mrb[0].mxu0
      %758 = vmatprep.mubr.f32.mxu0 0.0
      %759 = vmatmul.mubr.f32.gmra.mrb[0].mxu0 %v389
      %v760 = vpop.f32.mrb[0].mxu0
      %v761 = vadd.f32 0.0, %v760
      %v762 = vpop.f32.mrb[0].mxu0
      %763 = vmatprep.mubr.f32.mxu0 0.0
      %764 = vmatmul.mubr.f32.gmra.mrb[0].mxu0 %v392
      %v765 = vpop.f32.mrb[0].mxu0
      %v766 = vadd.f32 0.0, %v765
      %v767 = vpop.f32.mrb[0].mxu0
      %768 = vmatprep.mubr.f32.mxu0 0.0
      %769 = vmatmul.mubr.f32.gmra.mrb[0].mxu0 %v395
      %v770 = vpop.f32.mrb[0].mxu0
      %v771 = vadd.f32 0.0, %v770
      %v772 = vpop.f32.mrb[0].mxu0
      %773 = vmatprep.mubr.f32.mxu0 0.0
      %774 = vmatmul.mubr.f32.gmra.mrb[0].mxu0 %v398
      %v775 = vpop.f32.mrb[0].mxu0
      %v776 = vadd.f32 0.0, %v775
      %v777 = vpop.f32.mrb[0].mxu0
      %778 = vmatprep.mubr.f32.mxu0 0.0
      %779 = vmatmul.mubr.f32.gmra.mrb[0].mxu0 %v401
      %v780 = vpop.f32.mrb[0].mxu0
      %v781 = vadd.f32 0.0, %v780
      %v782 = vpop.f32.mrb[0].mxu0
      %783 = vmatprep.mubr.f32.mxu0 0.0
      %784 = vmatmul.mubr.f32.gmra.mrb[0].mxu0 %v404
      %v785 = vpop.f32.mrb[0].mxu0
      %v786 = vadd.f32 0.0, %v785
      %v787 = vpop.f32.mrb[0].mxu0
      %788 = vmatprep.mubr.f32.mxu0 0.0
      %789 = vmatmul.mubr.f32.gmra.mrb[0].mxu0 %v407
      %v790 = vpop.f32.mrb[0].mxu0
      %v791 = vadd.f32 0.0, %v790
      %v792 = vpop.f32.mrb[0].mxu0
      %793 = vdwg.mxu0
      %vm794 = vcmask 162816
      %795 = vst.msk [vmem:[%s145] sm:$0xff] %vm794, %v476
      %796 = vst.msk [vmem:[%s145 + $0x8] sm:$0xff] %vm794, %v481
      %797 = vst.msk [vmem:[%s145 + $0x10] sm:$0xff] %vm794, %v486
      %798 = vst.msk [vmem:[%s145 + $0x18] sm:$0xff] %vm794, %v491
      %799 = vst.msk [vmem:[%s145 + $0x20] sm:$0xff] %vm794, %v496
      %800 = vst.msk [vmem:[%s145 + $0x28] sm:$0xff] %vm794, %v501
      %801 = vst.msk [vmem:[%s145 + $0x30] sm:$0xff] %vm794, %v506
      %802 = vst.msk [vmem:[%s145 + $0x38] sm:$0xff] %vm794, %v511
      %803 = vst.msk [vmem:[%s145 + $0x40] sm:$0xff] %vm794, %v516
      %804 = vst.msk [vmem:[%s145 + $0x48] sm:$0xff] %vm794, %v521
      %805 = vst.msk [vmem:[%s145 + $0x50] sm:$0xff] %vm794, %v526
      %806 = vst.msk [vmem:[%s145 + $0x58] sm:$0xff] %vm794, %v531
      %807 = vst.msk [vmem:[%s145 + $0x60] sm:$0xff] %vm794, %v536
      %808 = vst.msk [vmem:[%s145 + $0x68] sm:$0xff] %vm794, %v541
      %809 = vst.msk [vmem:[%s145 + $0x70] sm:$0xff] %vm794, %v546
      %810 = vst.msk [vmem:[%s145 + $0x78] sm:$0xff] %vm794, %v551
      %811 = vst.msk [vmem:[%s145 + $0x80] sm:$0xff] %vm794, %v556
      %812 = vst.msk [vmem:[%s145 + $0x88] sm:$0xff] %vm794, %v561
      %813 = vst.msk [vmem:[%s145 + $0x90] sm:$0xff] %vm794, %v566
      %814 = vst.msk [vmem:[%s145 + $0x98] sm:$0xff] %vm794, %v571
      %815 = vst.msk [vmem:[%s145 + $0xa0] sm:$0xff] %vm794, %v576
      %816 = vst.msk [vmem:[%s145 + $0xa8] sm:$0xff] %vm794, %v581
      %817 = vst.msk [vmem:[%s145 + $0xb0] sm:$0xff] %vm794, %v586
      %818 = vst.msk [vmem:[%s145 + $0xb8] sm:$0xff] %vm794, %v591
      %819 = vst.msk [vmem:[%s145 + $0xc0] sm:$0xff] %vm794, %v596
      %820 = vst.msk [vmem:[%s145 + $0xc8] sm:$0xff] %vm794, %v601
      %821 = vst.msk [vmem:[%s145 + $0xd0] sm:$0xff] %vm794, %v606
      %822 = vst.msk [vmem:[%s145 + $0xd8] sm:$0xff] %vm794, %v611
      %823 = vst.msk [vmem:[%s145 + $0xe0] sm:$0xff] %vm794, %v616
      %824 = vst.msk [vmem:[%s145 + $0xe8] sm:$0xff] %vm794, %v621
      %825 = vst.msk [vmem:[%s145 + $0xf0] sm:$0xff] %vm794, %v626
      %826 = vst.msk [vmem:[%s145 + $0xf8] sm:$0xff] %vm794, %v631
      %827 = vst.msk [vmem:[%s145 + $0x100] sm:$0xff] %vm794, %v636
      %828 = vst.msk [vmem:[%s145 + $0x108] sm:$0xff] %vm794, %v641
      %829 = vst.msk [vmem:[%s145 + $0x110] sm:$0xff] %vm794, %v646
      %830 = vst.msk [vmem:[%s145 + $0x118] sm:$0xff] %vm794, %v651
      %831 = vst.msk [vmem:[%s145 + $0x120] sm:$0xff] %vm794, %v656
      %832 = vst.msk [vmem:[%s145 + $0x128] sm:$0xff] %vm794, %v661
      %833 = vst.msk [vmem:[%s145 + $0x130] sm:$0xff] %vm794, %v666
      %834 = vst.msk [vmem:[%s145 + $0x138] sm:$0xff] %vm794, %v671
      %835 = vst.msk [vmem:[%s145 + $0x140] sm:$0xff] %vm794, %v676
      %836 = vst.msk [vmem:[%s145 + $0x148] sm:$0xff] %vm794, %v681
      %837 = vst.msk [vmem:[%s145 + $0x150] sm:$0xff] %vm794, %v686
      %838 = vst.msk [vmem:[%s145 + $0x158] sm:$0xff] %vm794, %v691
      %839 = vst.msk [vmem:[%s145 + $0x160] sm:$0xff] %vm794, %v696
      %840 = vst.msk [vmem:[%s145 + $0x168] sm:$0xff] %vm794, %v701
      %841 = vst.msk [vmem:[%s145 + $0x170] sm:$0xff] %vm794, %v706
      %842 = vst.msk [vmem:[%s145 + $0x178] sm:$0xff] %vm794, %v711
      %843 = vst.msk [vmem:[%s145 + $0x180] sm:$0xff] %vm794, %v716
      %844 = vst.msk [vmem:[%s145 + $0x188] sm:$0xff] %vm794, %v721
      %845 = vst.msk [vmem:[%s145 + $0x190] sm:$0xff] %vm794, %v726
      %846 = vst.msk [vmem:[%s145 + $0x198] sm:$0xff] %vm794, %v731
      %847 = vst.msk [vmem:[%s145 + $0x1a0] sm:$0xff] %vm794, %v736
      %848 = vst.msk [vmem:[%s145 + $0x1a8] sm:$0xff] %vm794, %v741
      %849 = vst.msk [vmem:[%s145 + $0x1b0] sm:$0xff] %vm794, %v746
      %850 = vst.msk [vmem:[%s145 + $0x1b8] sm:$0xff] %vm794, %v751
      %851 = vst.msk [vmem:[%s145 + $0x1c0] sm:$0xff] %vm794, %v756
      %852 = vst.msk [vmem:[%s145 + $0x1c8] sm:$0xff] %vm794, %v761
      %853 = vst.msk [vmem:[%s145 + $0x1d0] sm:$0xff] %vm794, %v766
      %854 = vst.msk [vmem:[%s145 + $0x1d8] sm:$0xff] %vm794, %v771
      %855 = vst.msk [vmem:[%s145 + $0x1e0] sm:$0xff] %vm794, %v776
      %856 = vst.msk [vmem:[%s145 + $0x1e8] sm:$0xff] %vm794, %v781
      %857 = vst.msk [vmem:[%s145 + $0x1f0] sm:$0xff] %vm794, %v786
      %858 = vst.msk [vmem:[%s145 + $0x1f8] sm:$0xff] %vm794, %v791
      %s859 = smul.u32 64, %s13
      %p860 = scmp.lt.s32.totalorder %s859, 127
      %s861 = scalar_select %p860, %s859, 127
      %s862 = smul.addr %s861, 8
      %s863 = scalar_lea.vmem %s2, %s862
      // Predicated region
      $region29: #{tpu_custom_call.1} parent=27 // pred_check
        %p864 = pneg %p78
      $region30: #{tpu_custom_call.1} parent=27 // pred_check_branch
        %866 = sbr.rel (%p864) target = $region32
      $region31: #{tpu_custom_call.1} parent=27 // pred_region
        %s867 = smul.u32 64, %s13
      $region32: #{tpu_custom_call.1} parent=27 // pred_fallthru
        _
    $region28: #{tpu_custom_call.1} parent=5 // pred_fallthru
      _
    %p868 = scmp.le.s32.totalorder 2, %s8
    // Predicated region
    $region33: #{tpu_custom_call.1} parent=5 // pred_check
      %p869 = pneg %p868
    $region34: #{tpu_custom_call.1} parent=5 // pred_check_branch
      %871 = sbr.rel (%p869) target = $region36
    $region35: #{tpu_custom_call.1} parent=5 // pred_region
      %s872 = ssub.s32 %s8, 2
      // Predicated region
      $region37: #{tpu_custom_call.1} parent=35 // pred_check
        %p873 = pneg %p84
      $region38: #{tpu_custom_call.1} parent=35 // pred_check_branch
        %875 = sbr.rel (%p873) target = $region40
      $region39: #{tpu_custom_call.1} parent=35 // pred_region
        %s876 = smul.u32 64, %s14
        %p877 = scmp.lt.s32.totalorder %s876, 127
        %s878 = scalar_select %p877, %s876, 127
        %s879 = smul.addr %s878, 8
        %s880 = scalar_lea.vmem %s2, %s879
      $region40: #{tpu_custom_call.1} parent=35 // pred_fallthru
        _
    $region36: #{tpu_custom_call.1} parent=5 // pred_fallthru
      _
  $region6: #{tpu_custom_call.1} parent=0 // loop_footer
    %s12 = sadd.s32 1, %s8
  $region7: #{tpu_custom_call.1} parent=0 // loop_footer_branch
    %7 = sbr.rel target = $region3
  $region8: #{tpu_custom_call.1} parent=0 // loop_exit
    _

</llo_original>
